<compile_context>
chip_gen: v7x
topology: tpu7x:2x2x1
jax: 0.10.0
libtpu: 0.0.40
codegen_flags: <defaults>
</compile_context>

<pallas_src>
import functools

import jax
import jax.numpy as jnp
from jax.experimental import pallas as pl
from jax.experimental.pallas import tpu as pltpu


def _round_up(x, m):
    return ((x + m - 1) // m) * m


def deepcross_kernel(num_cross, num_deep,
                     out_b_ref,        # SMEM (1,)        scalar output bias
                     feat_ref,         # [F_pad, TILE_B]  raw features (transposed, padded)
                     w0_ref,           # [D_pad, F_pad]   fused block-diagonal projection
                     cw_ref,           # [L, D_pad, D_pad]
                     cb_ref,           # [L, D_pad, 1]
                     *rest):
    """rest = deep_w0T, deep_b0T, ..., out_wc, out_wd, out_ref."""
    deep_refs = rest[:2 * num_deep]
    out_wc_ref, out_wd_ref, out_ref = rest[2 * num_deep:]
    f32 = jnp.float32

    # Fused feature projection:
    #   x0 = blockdiag(I_user|item, 1_age, gender_emb, occ_emb, movie_emb)^T @ feat
    x0 = jnp.dot(w0_ref[...], feat_ref[...], preferred_element_type=f32)   # [D_pad, TILE_B]

    # Cross network: x_{i+1} = x0 * (W_i x_i) + b_i + x_i   (feature-major form)
    x = x0
    for i in range(num_cross):
        xw = jnp.dot(cw_ref[i], x, preferred_element_type=f32)
        x = x0 * xw + cb_ref[i] + x

    # Deep network: stack of Linear + ReLU (feature-major form)
    h = x0
    for i in range(num_deep):
        h = jnp.maximum(
            jnp.dot(deep_refs[2 * i][...], h, preferred_element_type=f32)
            + deep_refs[2 * i + 1][...], 0.0)

    # Output head: two small dots instead of a lane-axis concat, scalar bias from SMEM.
    bias = out_b_ref[0]
    logit = (jnp.dot(out_wc_ref[...], x, preferred_element_type=f32)
             + jnp.dot(out_wd_ref[...], h, preferred_element_type=f32)
             + bias)                                                       # [1, TILE_B]
    out_ref[...] = jax.nn.sigmoid(logit)                                   # lane-dense store


def deepcross_forward(x, params, *, tile_b=None):
    """x: [B, 45] float32 raw feature matrix (cols: uid, iid, age, gender(2), occ(21), movie(19))."""
    E = params["user_emb"].shape[1]
    D = 5 * E + 1                       # 41
    F_in = 2 * E + 43                   # 59 (user_e, item_e, age, gender, occ, movie raw)
    D_pad = _round_up(D, 8)             # 48
    F_pad = _round_up(F_in, 8)          # 64

    B = x.shape[0]
    if tile_b is None:
        # Big tiles amortize per-grid-step overhead; don't over-pad tiny batches.
        tile_b = min(512, _round_up(B, 128))
    B_pad = _round_up(B, tile_b)

    cross_w = params["cross_w"]
    cross_b = params["cross_b"]
    L = cross_w.shape[0]
    deep_ws = params["deep_ws"]
    deep_bs = params["deep_bs"]
    num_deep = len(deep_ws)

    # --- glue: embedding gathers + transposed, padded feature slab [F_pad, B_pad] ---
    uid = x[:, 0].astype(jnp.int32)
    iid = x[:, 1].astype(jnp.int32)
    user_e = jnp.take(params["user_emb"], uid, axis=0)
    item_e = jnp.take(params["item_emb"], iid, axis=0)
    feat = jnp.concatenate([user_e, item_e, x[:, 2:45]], axis=1)            # [B, F_in]
    feat_t = jnp.pad(feat.T, ((0, F_pad - F_in), (0, B_pad - B)))           # [F_pad, B_pad]

    # --- fused block-diagonal projection weight W_feat: [F_in, D] ---
    W_feat = jnp.zeros((F_in, D), jnp.float32)
    W_feat = W_feat.at[:2 * E, :2 * E].set(jnp.eye(2 * E, dtype=jnp.float32))     # user/item passthrough
    W_feat = W_feat.at[2 * E, 2 * E].set(1.0)                                     # age passthrough
    W_feat = W_feat.at[2 * E + 1:2 * E + 3, 2 * E + 1:3 * E + 1].set(params["gender_emb"])
    W_feat = W_feat.at[2 * E + 3:2 * E + 24, 3 * E + 1:4 * E + 1].set(params["occ_emb"])
    W_feat = W_feat.at[2 * E + 24:2 * E + 43, 4 * E + 1:5 * E + 1].set(params["movie_emb"])
    w0_t = jnp.pad(W_feat.T, ((0, D_pad - D), (0, F_pad - F_in)))           # [D_pad, F_pad]

    # --- transposed + zero-padded cross / deep / output params ---
    cw_t = jnp.pad(jnp.transpose(cross_w, (0, 2, 1)),
                   ((0, 0), (0, D_pad - D), (0, D_pad - D)))                # [L, D_pad, D_pad]
    cb_t = jnp.pad(jnp.transpose(cross_b, (0, 2, 1)),
                   ((0, 0), (0, D_pad - D), (0, 0)))                        # [L, D_pad, 1]

    deep_inputs, deep_specs = [], []
    in_dim, in_pad = D, D_pad
    for w, b in zip(deep_ws, deep_bs):
        out_dim = w.shape[1]
        out_pad = _round_up(out_dim, 8)
        w_t = jnp.pad(w.T, ((0, out_pad - out_dim), (0, in_pad - in_dim)))  # [out_pad, in_pad]
        b_t = jnp.pad(b.T, ((0, out_pad - out_dim), (0, 0)))                # [out_pad, 1]
        deep_inputs += [w_t, b_t]
        deep_specs += [pl.BlockSpec((out_pad, in_pad), lambda i: (0, 0)),
                       pl.BlockSpec((out_pad, 1), lambda i: (0, 0))]
        in_dim, in_pad = out_dim, out_pad
    H_last, H_last_pad = in_dim, in_pad

    out_w = params["out_w"]                                                 # [D + H_last, 1]
    out_wc = jnp.pad(out_w[:D].T, ((0, 0), (0, D_pad - D)))                 # [1, D_pad]
    out_wd = jnp.pad(out_w[D:].T, ((0, 0), (0, H_last_pad - H_last)))       # [1, H_last_pad]
    out_b = params["out_b"].reshape((1,))                                   # SMEM scalar

    kernel = functools.partial(deepcross_kernel, L, num_deep)

    inputs = [out_b, feat_t, w0_t, cw_t, cb_t] + deep_inputs + [out_wc, out_wd]
    in_specs = ([pl.BlockSpec(memory_space=pltpu.MemorySpace.SMEM),          # out_b scalar
                 pl.BlockSpec((F_pad, tile_b), lambda i: (0, i)),            # feat: batch-tiled
                 pl.BlockSpec((D_pad, F_pad), lambda i: (0, 0)),             # resident weights
                 pl.BlockSpec((L, D_pad, D_pad), lambda i: (0, 0, 0)),
                 pl.BlockSpec((L, D_pad, 1), lambda i: (0, 0, 0))]
                + deep_specs
                + [pl.BlockSpec((1, D_pad), lambda i: (0, 0)),
                   pl.BlockSpec((1, H_last_pad), lambda i: (0, 0))])

    out = pl.pallas_call(
        kernel,
        out_shape=jax.ShapeDtypeStruct((1, B_pad), jnp.float32),
        grid=(B_pad // tile_b,),
        in_specs=in_specs,
        out_specs=pl.BlockSpec((1, tile_b), lambda i: (0, i)),               # lane-dense output
        compiler_params=pltpu.CompilerParams(
            dimension_semantics=("parallel",),
            vmem_limit_bytes=32 * 1024 * 1024),
    )(*inputs)

    # TODO(synk): optionally cast feat/weights to bf16 (f32 accumulation) on v6e/v7x for
    # lower DMA traffic; kept f32 here for exact parity with the PyTorch module.
    return out[0, :B][:, None]


def deepcross_reference(x, params):
    """Plain-JAX reference for correctness checking."""
    user_ids = x[:, 0].astype(jnp.int32)
    item_ids = x[:, 1].astype(jnp.int32)
    user_e = jnp.take(params["user_emb"], user_ids, axis=0)
    item_e = jnp.take(params["item_emb"], item_ids, axis=0)
    age = x[:, 2:3]
    gender_e = x[:, 3:5] @ params["gender_emb"]
    occ_e = x[:, 5:26] @ params["occ_emb"]
    movie_e = x[:, 26:45] @ params["movie_emb"]
    x0 = jnp.concatenate([user_e, item_e, age, gender_e, occ_e, movie_e], axis=1)

    xc = x0
    for i in range(params["cross_w"].shape[0]):
        xc = x0 * (xc @ params["cross_w"][i]) + params["cross_b"][i] + xc

    h = x0
    for w, b in zip(params["deep_ws"], params["deep_bs"]):
        h = jnp.maximum(h @ w + b, 0.0)

    combined = jnp.concatenate([xc, h], axis=1)
    return jax.nn.sigmoid(combined @ params["out_w"] + params["out_b"])


def xavier_normal(key, shape):
    fan_in, fan_out = shape[0], shape[1]
    std = (2.0 / (fan_in + fan_out)) ** 0.5
    return std * jax.random.normal(key, shape, dtype=jnp.float32)


def init_params(key, num_users, num_items, cross_layers, deep_hidden_units, embedding_dim):
    D = embedding_dim * 5 + 1
    keys = jax.random.split(key, 10 + 2 * len(deep_hidden_units))
    params = {
        "user_emb": xavier_normal(keys[0], (num_users, embedding_dim)),
        "item_emb": xavier_normal(keys[1], (num_items, embedding_dim)),
        "gender_emb": xavier_normal(keys[2], (2, embedding_dim)),
        "occ_emb": xavier_normal(keys[3], (21, embedding_dim)),
        "movie_emb": xavier_normal(keys[4], (19, embedding_dim)),
        # CrossNetwork: Linear(D, D, bias=False) weights; biases initialized to zeros (as in __init__)
        "cross_w": 0.1 * jax.random.normal(keys[5], (cross_layers, D, D), dtype=jnp.float32),
        "cross_b": jnp.zeros((cross_layers, 1, D), dtype=jnp.float32),
    }
    deep_ws, deep_bs = [], []
    in_dim = D
    for li, h in enumerate(deep_hidden_units):
        deep_ws.append(0.1 * jax.random.normal(keys[6 + 2 * li], (in_dim, h), dtype=jnp.float32))
        deep_bs.append(0.01 * jax.random.normal(keys[7 + 2 * li], (1, h), dtype=jnp.float32))
        in_dim = h
    params["deep_ws"] = deep_ws
    params["deep_bs"] = deep_bs
    params["out_w"] = 0.1 * jax.random.normal(keys[-2], (D + deep_hidden_units[-1], 1), dtype=jnp.float32)
    params["out_b"] = 0.01 * jax.random.normal(keys[-1], (1, 1), dtype=jnp.float32)
    return params


if __name__ == "__main__":
    # Small, deterministic configuration
    num_users, num_items = 10, 20
    embedding_dim = 8
    cross_layers = 2
    deep_hidden_units = [32, 16]
    B = 4

    key = jax.random.PRNGKey(0)
    kp, ku, ki, kf = jax.random.split(key, 4)

    params = init_params(kp, num_users, num_items, cross_layers, deep_hidden_units, embedding_dim)

    # Build raw input x: [B, 45]
    uid = jax.random.randint(ku, (B,), 0, num_users).astype(jnp.float32)
    iid = jax.random.randint(ki, (B,), 0, num_items).astype(jnp.float32)
    rest = jax.random.uniform(kf, (B, 43), dtype=jnp.float32)  # age(1) + gender(2) + occ(21) + movie(19)
    x = jnp.concatenate([uid[:, None], iid[:, None], rest], axis=1)

    out = deepcross_forward(x, params)
    out = jax.block_until_ready(out)

    ref = deepcross_reference(x, params)
    assert out.shape == (B, 1)
    assert jnp.allclose(out, ref, rtol=1e-4, atol=1e-4), (out, ref)

    print("KERNEL_OK")
</pallas_src>

<mosaic_0001>
module attributes {stable_mosaic.version = 11 : i64} {
  func.func @deepcross_kernel(%arg0: i32, %arg1: memref<1xf32, #tpu.memory_space<smem>>, %arg2: memref<64x128xf32, #tpu.memory_space<vmem>>, %arg3: memref<48x64xf32, #tpu.memory_space<vmem>>, %arg4: memref<2x48x48xf32, #tpu.memory_space<vmem>>, %arg5: memref<2x48x1xf32, #tpu.memory_space<vmem>>, %arg6: memref<32x48xf32, #tpu.memory_space<vmem>>, %arg7: memref<32x1xf32, #tpu.memory_space<vmem>>, %arg8: memref<16x32xf32, #tpu.memory_space<vmem>>, %arg9: memref<16x1xf32, #tpu.memory_space<vmem>>, %arg10: memref<1x48xf32, #tpu.memory_space<vmem>>, %arg11: memref<1x16xf32, #tpu.memory_space<vmem>>, %arg12: memref<1x128xf32, #tpu.memory_space<vmem>>) attributes {dimension_semantics = [#tpu.dimension_semantics<parallel>], iteration_bounds = array<i64: 1>, scalar_prefetch = 0 : i64, scratch_operands = 0 : i64, tpu.core_type = #tpu.core_type<tc>, window_params = [{transform_indices = @transform_0, window_bounds = array<i64: 1>}, {transform_indices = @transform_1, window_bounds = array<i64: 64, 128>}, {pipeline_mode = #tpu.pipeline_mode<synchronous>, transform_indices = @transform_2, window_bounds = array<i64: 48, 64>}, {pipeline_mode = #tpu.pipeline_mode<synchronous>, transform_indices = @transform_3, window_bounds = array<i64: 2, 48, 48>}, {pipeline_mode = #tpu.pipeline_mode<synchronous>, transform_indices = @transform_4, window_bounds = array<i64: 2, 48, 1>}, {pipeline_mode = #tpu.pipeline_mode<synchronous>, transform_indices = @transform_5, window_bounds = array<i64: 32, 48>}, {pipeline_mode = #tpu.pipeline_mode<synchronous>, transform_indices = @transform_6, window_bounds = array<i64: 32, 1>}, {pipeline_mode = #tpu.pipeline_mode<synchronous>, transform_indices = @transform_7, window_bounds = array<i64: 16, 32>}, {pipeline_mode = #tpu.pipeline_mode<synchronous>, transform_indices = @transform_8, window_bounds = array<i64: 16, 1>}, {pipeline_mode = #tpu.pipeline_mode<synchronous>, transform_indices = @transform_9, window_bounds = array<i64: 1, 48>}, {pipeline_mode = #tpu.pipeline_mode<synchronous>, transform_indices = @transform_10, window_bounds = array<i64: 1, 16>}, {transform_indices = @transform_11, window_bounds = array<i64: 1, 128>}]} {
    %c0 = arith.constant 0 : index
    %c0_0 = arith.constant 0 : index
    %0 = vector.load %arg3[%c0, %c0_0] : memref<48x64xf32, #tpu.memory_space<vmem>>, vector<48x64xf32>
    %c0_1 = arith.constant 0 : index
    %c0_2 = arith.constant 0 : index
    %1 = vector.load %arg2[%c0_1, %c0_2] : memref<64x128xf32, #tpu.memory_space<vmem>>, vector<64x128xf32>
    %cst = arith.constant dense<0.000000e+00> : vector<48x128xf32>
    %2 = tpu.matmul %0, %1, %cst {dimension_numbers = #tpu.dot_dimension_numbers<[1], [0], [0], [1], [0, 0, 1, 1], [], []>} : vector<48x64xf32>, vector<64x128xf32>, vector<48x128xf32> -> vector<48x128xf32>
    %c0_3 = arith.constant 0 : index
    %c0_4 = arith.constant 0 : index
    %c0_5 = arith.constant 0 : index
    %3 = vector.load %arg4[%c0_3, %c0_4, %c0_5] : memref<2x48x48xf32, #tpu.memory_space<vmem>>, vector<1x48x48xf32>
    %4 = vector.shape_cast %3 : vector<1x48x48xf32> to vector<48x48xf32>
    %cst_6 = arith.constant dense<0.000000e+00> : vector<48x128xf32>
    %5 = tpu.matmul %4, %2, %cst_6 {dimension_numbers = #tpu.dot_dimension_numbers<[1], [0], [0], [1], [0, 0, 1, 1], [], []>} : vector<48x48xf32>, vector<48x128xf32>, vector<48x128xf32> -> vector<48x128xf32>
    %6 = arith.mulf %2, %5 : vector<48x128xf32>
    %c0_7 = arith.constant 0 : index
    %c0_8 = arith.constant 0 : index
    %c0_9 = arith.constant 0 : index
    %7 = vector.load %arg5[%c0_7, %c0_8, %c0_9] : memref<2x48x1xf32, #tpu.memory_space<vmem>>, vector<1x48x1xf32>
    %8 = vector.shape_cast %7 : vector<1x48x1xf32> to vector<48x1xf32>
    %9 = vector.broadcast %8 : vector<48x1xf32> to vector<48x128xf32>
    %10 = arith.addf %6, %9 : vector<48x128xf32>
    %11 = arith.addf %10, %2 : vector<48x128xf32>
    %c1 = arith.constant 1 : index
    %c0_10 = arith.constant 0 : index
    %c0_11 = arith.constant 0 : index
    %12 = vector.load %arg4[%c1, %c0_10, %c0_11] : memref<2x48x48xf32, #tpu.memory_space<vmem>>, vector<1x48x48xf32>
    %13 = vector.shape_cast %12 : vector<1x48x48xf32> to vector<48x48xf32>
    %cst_12 = arith.constant dense<0.000000e+00> : vector<48x128xf32>
    %14 = tpu.matmul %13, %11, %cst_12 {dimension_numbers = #tpu.dot_dimension_numbers<[1], [0], [0], [1], [0, 0, 1, 1], [], []>} : vector<48x48xf32>, vector<48x128xf32>, vector<48x128xf32> -> vector<48x128xf32>
    %15 = arith.mulf %2, %14 : vector<48x128xf32>
    %c1_13 = arith.constant 1 : index
    %c0_14 = arith.constant 0 : index
    %c0_15 = arith.constant 0 : index
    %16 = vector.load %arg5[%c1_13, %c0_14, %c0_15] : memref<2x48x1xf32, #tpu.memory_space<vmem>>, vector<1x48x1xf32>
    %17 = vector.shape_cast %16 : vector<1x48x1xf32> to vector<48x1xf32>
    %18 = vector.broadcast %17 : vector<48x1xf32> to vector<48x128xf32>
    %19 = arith.addf %15, %18 : vector<48x128xf32>
    %20 = arith.addf %19, %11 : vector<48x128xf32>
    %c0_16 = arith.constant 0 : index
    %c0_17 = arith.constant 0 : index
    %21 = vector.load %arg6[%c0_16, %c0_17] : memref<32x48xf32, #tpu.memory_space<vmem>>, vector<32x48xf32>
    %cst_18 = arith.constant dense<0.000000e+00> : vector<32x128xf32>
    %22 = tpu.matmul %21, %2, %cst_18 {dimension_numbers = #tpu.dot_dimension_numbers<[1], [0], [0], [1], [0, 0, 1, 1], [], []>} : vector<32x48xf32>, vector<48x128xf32>, vector<32x128xf32> -> vector<32x128xf32>
    %c0_19 = arith.constant 0 : index
    %c0_20 = arith.constant 0 : index
    %23 = vector.load %arg7[%c0_19, %c0_20] : memref<32x1xf32, #tpu.memory_space<vmem>>, vector<32x1xf32>
    %24 = vector.broadcast %23 : vector<32x1xf32> to vector<32x128xf32>
    %25 = arith.addf %22, %24 : vector<32x128xf32>
    %cst_21 = arith.constant 0.000000e+00 : f32
    %26 = vector.broadcast %cst_21 : f32 to vector<32x128xf32>
    %27 = arith.maximumf %25, %26 : vector<32x128xf32>
    %c0_22 = arith.constant 0 : index
    %c0_23 = arith.constant 0 : index
    %28 = vector.load %arg8[%c0_22, %c0_23] : memref<16x32xf32, #tpu.memory_space<vmem>>, vector<16x32xf32>
    %cst_24 = arith.constant dense<0.000000e+00> : vector<16x128xf32>
    %29 = tpu.matmul %28, %27, %cst_24 {dimension_numbers = #tpu.dot_dimension_numbers<[1], [0], [0], [1], [0, 0, 1, 1], [], []>} : vector<16x32xf32>, vector<32x128xf32>, vector<16x128xf32> -> vector<16x128xf32>
    %c0_25 = arith.constant 0 : index
    %c0_26 = arith.constant 0 : index
    %30 = vector.load %arg9[%c0_25, %c0_26] : memref<16x1xf32, #tpu.memory_space<vmem>>, vector<16x1xf32>
    %31 = vector.broadcast %30 : vector<16x1xf32> to vector<16x128xf32>
    %32 = arith.addf %29, %31 : vector<16x128xf32>
    %cst_27 = arith.constant 0.000000e+00 : f32
    %33 = vector.broadcast %cst_27 : f32 to vector<16x128xf32>
    %34 = arith.maximumf %32, %33 : vector<16x128xf32>
    %c0_28 = arith.constant 0 : index
    %35 = memref.load %arg1[%c0_28] : memref<1xf32, #tpu.memory_space<smem>>
    %c0_29 = arith.constant 0 : index
    %c0_30 = arith.constant 0 : index
    %36 = vector.load %arg10[%c0_29, %c0_30] : memref<1x48xf32, #tpu.memory_space<vmem>>, vector<1x48xf32>
    %cst_31 = arith.constant dense<0.000000e+00> : vector<1x128xf32>
    %37 = tpu.matmul %36, %20, %cst_31 {dimension_numbers = #tpu.dot_dimension_numbers<[1], [0], [0], [1], [0, 0, 1, 1], [], []>} : vector<1x48xf32>, vector<48x128xf32>, vector<1x128xf32> -> vector<1x128xf32>
    %c0_32 = arith.constant 0 : index
    %c0_33 = arith.constant 0 : index
    %38 = vector.load %arg11[%c0_32, %c0_33] : memref<1x16xf32, #tpu.memory_space<vmem>>, vector<1x16xf32>
    %cst_34 = arith.constant dense<0.000000e+00> : vector<1x128xf32>
    %39 = tpu.matmul %38, %34, %cst_34 {dimension_numbers = #tpu.dot_dimension_numbers<[1], [0], [0], [1], [0, 0, 1, 1], [], []>} : vector<1x16xf32>, vector<16x128xf32>, vector<1x128xf32> -> vector<1x128xf32>
    %40 = arith.addf %37, %39 : vector<1x128xf32>
    %41 = vector.broadcast %35 : f32 to vector<1x128xf32>
    %42 = arith.addf %40, %41 : vector<1x128xf32>
    %43 = arith.negf %42 : vector<1x128xf32>
    %44 = math.exp %43 : vector<1x128xf32>
    %cst_35 = arith.constant 1.000000e+00 : f32
    %45 = vector.broadcast %cst_35 : f32 to vector<1x128xf32>
    %46 = arith.addf %45, %44 : vector<1x128xf32>
    %47 = arith.divf %45, %46 : vector<1x128xf32>
    %c0_36 = arith.constant 0 : index
    %c0_37 = arith.constant 0 : index
    %48 = vector.load %arg12[%c0_36, %c0_37] : memref<1x128xf32, #tpu.memory_space<vmem>>, vector<1x128xf32>
    tpu.vector_store %arg12[%c0_36, %c0_37], %47 {strides = array<i32>} : memref<1x128xf32, #tpu.memory_space<vmem>>, vector<1x128xf32>,
    return
  }
  func.func @transform_0(%arg0: i32) -> i32 {
    %c0_i32 = arith.constant 0 : i32
    %c0_i32_0 = arith.constant 0 : i32
    return %c0_i32 : i32
  }
  func.func @transform_1(%arg0: i32) -> (i32, i32) {
    %c0_i32 = arith.constant 0 : i32
    %c0_i32_0 = arith.constant 0 : i32
    return %c0_i32, %arg0 : i32, i32
  }
  func.func @transform_2(%arg0: i32) -> (i32, i32) {
    %c0_i32 = arith.constant 0 : i32
    %c0_i32_0 = arith.constant 0 : i32
    %c0_i32_1 = arith.constant 0 : i32
    return %c0_i32, %c0_i32_0 : i32, i32
  }
  func.func @transform_3(%arg0: i32) -> (i32, i32, i32) {
    %c0_i32 = arith.constant 0 : i32
    %c0_i32_0 = arith.constant 0 : i32
    %c0_i32_1 = arith.constant 0 : i32
    %c0_i32_2 = arith.constant 0 : i32
    return %c0_i32, %c0_i32_0, %c0_i32_1 : i32, i32, i32
  }
  func.func @transform_4(%arg0: i32) -> (i32, i32, i32) {
    %c0_i32 = arith.constant 0 : i32
    %c0_i32_0 = arith.constant 0 : i32
    %c0_i32_1 = arith.constant 0 : i32
    %c0_i32_2 = arith.constant 0 : i32
    return %c0_i32, %c0_i32_0, %c0_i32_1 : i32, i32, i32
  }
  func.func @transform_5(%arg0: i32) -> (i32, i32) {
    %c0_i32 = arith.constant 0 : i32
    %c0_i32_0 = arith.constant 0 : i32
    %c0_i32_1 = arith.constant 0 : i32
    return %c0_i32, %c0_i32_0 : i32, i32
  }
  func.func @transform_6(%arg0: i32) -> (i32, i32) {
    %c0_i32 = arith.constant 0 : i32
    %c0_i32_0 = arith.constant 0 : i32
    %c0_i32_1 = arith.constant 0 : i32
    return %c0_i32, %c0_i32_0 : i32, i32
  }
  func.func @transform_7(%arg0: i32) -> (i32, i32) {
    %c0_i32 = arith.constant 0 : i32
    %c0_i32_0 = arith.constant 0 : i32
    %c0_i32_1 = arith.constant 0 : i32
    return %c0_i32, %c0_i32_0 : i32, i32
  }
  func.func @transform_8(%arg0: i32) -> (i32, i32) {
    %c0_i32 = arith.constant 0 : i32
    %c0_i32_0 = arith.constant 0 : i32
    %c0_i32_1 = arith.constant 0 : i32
    return %c0_i32, %c0_i32_0 : i32, i32
  }
  func.func @transform_9(%arg0: i32) -> (i32, i32) {
    %c0_i32 = arith.constant 0 : i32
    %c0_i32_0 = arith.constant 0 : i32
    %c0_i32_1 = arith.constant 0 : i32
    return %c0_i32, %c0_i32_0 : i32, i32
  }
  func.func @transform_10(%arg0: i32) -> (i32, i32) {
    %c0_i32 = arith.constant 0 : i32
    %c0_i32_0 = arith.constant 0 : i32
    %c0_i32_1 = arith.constant 0 : i32
    return %c0_i32, %c0_i32_0 : i32, i32
  }
  func.func @transform_11(%arg0: i32) -> (i32, i32) {
    %c0_i32 = arith.constant 0 : i32
    %c0_i32_0 = arith.constant 0 : i32
    return %c0_i32, %arg0 : i32, i32
  }
}

</mosaic_0001>

<llo_original>
// kernel: tpu_custom_call.1
$region0: #{tpu_custom_call.1}
  #allocation0 [shape = 'u32[]', space=smem, size = 0x4, offset = 0x4, fixed_abs, tag = 'smem constant byte address 0x4 - core index']
  #allocation1 [shape = 'u32[144,128]{1,0:T(1,128)}', space=vmem, size = 0x12000, scoped, tag = 'internal scratch']
  #allocation2 [shape = 'f32[1]{0:T(128)S(6)}', space=smem, size = 0x200, scoped, tag = 'scoped memory for tpu_custom_call.1']
  %s0 = inlined_call_operand.<no memory space> [shape: f32[1], index: 0, kind: input, shape index: {}]
  %s1 = inlined_call_operand.hbm [shape: f32[64,128], index: 1, kind: input, shape index: {}]
  %s2 = inlined_call_operand.vmem [shape: f32[48,64], index: 2, kind: input, shape index: {}]
  %s3 = inlined_call_operand.vmem [shape: f32[2,48,48], index: 3, kind: input, shape index: {}]
  %s4 = inlined_call_operand.vmem [shape: f32[2,48,1], index: 4, kind: input, shape index: {}]
  %s5 = inlined_call_operand.hbm [shape: f32[32,48], index: 5, kind: input, shape index: {}]
  %s6 = inlined_call_operand.vmem [shape: f32[32,1], index: 6, kind: input, shape index: {}]
  %s7 = inlined_call_operand.vmem [shape: f32[16,32], index: 7, kind: input, shape index: {}]
  %s8 = inlined_call_operand.vmem [shape: f32[16,1], index: 8, kind: input, shape index: {}]
  %s9 = inlined_call_operand.vmem [shape: f32[1,48], index: 9, kind: input, shape index: {}]
  %s10 = inlined_call_operand.vmem [shape: f32[1,16], index: 10, kind: input, shape index: {}]
  %s11 = inlined_call_operand.hbm [shape: f32[1,128], index: 11, kind: output, shape index: {}]
  %s12 = sld [smem:[#allocation0]]
  $region62: #{tpu_custom_call.1} parent=0
    _
  %s14 = ssub.s32 1, %s12
  %s15 = scalar_select 0, %s14, %s12
  %16 = sst [smem:[#allocation2]] %s0
  $region1: #{tpu_custom_call.1} parent=0
    #allocation3 [shape = 'u8[32768]{0}', space=vmem, size = 0x8000, scoped, tag = 'input window, operand 1, single buffered']
    #allocation4 [shape = 's32[1]{0}', space=sflag, size = 0x4, scoped, tag = 'scoped memory for tpu_custom_call.1']
    #allocation5 [shape = 's32[1]{0}', space=sflag, size = 0x4, scoped, tag = 'scoped memory for tpu_custom_call.1']
    #allocation6 [shape = 'u8[16384]{0}', space=vmem, size = 0x4000, scoped, tag = 'input window, operand 5, single buffered']
    #allocation7 [shape = 's32[1]{0}', space=sflag, size = 0x4, scoped, tag = 'scoped memory for tpu_custom_call.1']
    #allocation8 [shape = 'u8[512]{0}', space=vmem, size = 0x400, scoped, tag = 'output window, operand 0, single buffered']
    %17 = vsyncpa [#allocation4], 0
    %18 = vsyncpa [#allocation7], 0
    %19 = vsyncpa [#allocation5], 0
    // Predicated region
    $region2: #{tpu_custom_call.1} parent=1 // pred_check
      _
    $region3: #{tpu_custom_call.1} parent=1 // pred_check_branch
      %21 = sbr.rel (0) target = $region5
    $region4: #{tpu_custom_call.1} parent=1 // pred_region
      _
    $region5: #{tpu_custom_call.1} parent=1 // pred_fallthru
      _
    // Predicated region
    $region6: #{tpu_custom_call.1} parent=1 // pred_check
      _
    $region7: #{tpu_custom_call.1} parent=1 // pred_check_branch
      %23 = sbr.rel (0) target = $region9
    $region8: #{tpu_custom_call.1} parent=1 // pred_region
      %s25 = ssub.s32 1024, 1024
      %26 = vsyncadd [#allocation4], %s25
      %s27 = sshll.u32 [#allocation3], 4
      %s28 = int_to_ptr.vmem [resolvable:$true] %s27
      %33 = dma.hbm_to_vmem [thread:$0]  %s1, 1024, %s28, [#allocation4], 128, 128, 8
    $region9: #{tpu_custom_call.1} parent=1 // pred_fallthru
      _
    // Predicated region
    $region10: #{tpu_custom_call.1} parent=1 // pred_check
      _
    $region11: #{tpu_custom_call.1} parent=1 // pred_check_branch
      %35 = sbr.rel (0) target = $region13
    $region12: #{tpu_custom_call.1} parent=1 // pred_region
      _
    $region13: #{tpu_custom_call.1} parent=1 // pred_fallthru
      _
    // Predicated region
    $region14: #{tpu_custom_call.1} parent=1 // pred_check
      _
    $region15: #{tpu_custom_call.1} parent=1 // pred_check_branch
      %37 = sbr.rel (0) target = $region17
    $region16: #{tpu_custom_call.1} parent=1 // pred_region
      _
    $region17: #{tpu_custom_call.1} parent=1 // pred_fallthru
      _
    // Predicated region
    $region18: #{tpu_custom_call.1} parent=1 // pred_check
      _
    $region19: #{tpu_custom_call.1} parent=1 // pred_check_branch
      %39 = sbr.rel (0) target = $region21
    $region20: #{tpu_custom_call.1} parent=1 // pred_region
      _
    $region21: #{tpu_custom_call.1} parent=1 // pred_fallthru
      _
    // Predicated region
    $region22: #{tpu_custom_call.1} parent=1 // pred_check
      _
    $region23: #{tpu_custom_call.1} parent=1 // pred_check_branch
      %41 = sbr.rel (0) target = $region25
    $region24: #{tpu_custom_call.1} parent=1 // pred_region
      %s43 = ssub.s32 512, 512
      %44 = vsyncadd [#allocation7], %s43
      %s45 = sshll.u32 [#allocation6], 4
      %s46 = int_to_ptr.vmem [resolvable:$true] %s45
      %51 = dma.hbm_to_vmem [thread:$0]  %s5, 512, %s46, [#allocation7], 128, 128, 8
    $region25: #{tpu_custom_call.1} parent=1 // pred_fallthru
      _
    // Predicated region
    $region26: #{tpu_custom_call.1} parent=1 // pred_check
      _
    $region27: #{tpu_custom_call.1} parent=1 // pred_check_branch
      %53 = sbr.rel (0) target = $region29
    $region28: #{tpu_custom_call.1} parent=1 // pred_region
      _
    $region29: #{tpu_custom_call.1} parent=1 // pred_fallthru
      _
    // Predicated region
    $region30: #{tpu_custom_call.1} parent=1 // pred_check
      _
    $region31: #{tpu_custom_call.1} parent=1 // pred_check_branch
      %55 = sbr.rel (0) target = $region33
    $region32: #{tpu_custom_call.1} parent=1 // pred_region
      _
    $region33: #{tpu_custom_call.1} parent=1 // pred_fallthru
      _
    // Predicated region
    $region34: #{tpu_custom_call.1} parent=1 // pred_check
      _
    $region35: #{tpu_custom_call.1} parent=1 // pred_check_branch
      %57 = sbr.rel (0) target = $region37
    $region36: #{tpu_custom_call.1} parent=1 // pred_region
      _
    $region37: #{tpu_custom_call.1} parent=1 // pred_fallthru
      _
    // Predicated region
    $region38: #{tpu_custom_call.1} parent=1 // pred_check
      _
    $region39: #{tpu_custom_call.1} parent=1 // pred_check_branch
      %59 = sbr.rel (0) target = $region41
    $region40: #{tpu_custom_call.1} parent=1 // pred_region
      _
    $region41: #{tpu_custom_call.1} parent=1 // pred_fallthru
      _
    // Predicated region
    $region42: #{tpu_custom_call.1} parent=1 // pred_check
      _
    $region43: #{tpu_custom_call.1} parent=1 // pred_check_branch
      %61 = sbr.rel (0) target = $region45
    $region44: #{tpu_custom_call.1} parent=1 // pred_region
      _
    $region45: #{tpu_custom_call.1} parent=1 // pred_fallthru
      _
    // Predicated region
    $region46: #{tpu_custom_call.1} parent=1 // pred_check
      _
    $region47: #{tpu_custom_call.1} parent=1 // pred_check_branch
      %63 = sbr.rel (0) target = $region49
    $region48: #{tpu_custom_call.1} parent=1 // pred_region
      %64 = dma.done [#allocation4], 1024
    $region49: #{tpu_custom_call.1} parent=1 // pred_fallthru
      _
    // Predicated region
    $region50: #{tpu_custom_call.1} parent=1 // pred_check
      _
    $region51: #{tpu_custom_call.1} parent=1 // pred_check_branch
      %66 = sbr.rel (0) target = $region53
    $region52: #{tpu_custom_call.1} parent=1 // pred_region
      %67 = dma.done [#allocation7], 512
    $region53: #{tpu_custom_call.1} parent=1 // pred_fallthru
      _
    %v68 = vld [vmem:[%s2] sm:$0xff]
    %v69 = vld [vmem:[%s2 + $0x8] sm:$0xff]
    %v70 = vld [vmem:[%s2 + $0x10] sm:$0xff]
    %v71 = vld [vmem:[%s2 + $0x18] sm:$0xff]
    %v72 = vld [vmem:[%s2 + $0x20] sm:$0xff]
    %v73 = vld [vmem:[%s2 + $0x28] sm:$0xff]
    %v74 = vld [vmem:[#allocation3] sm:$0xff]
    %v75 = vld [vmem:[#allocation3 + $0x8] sm:$0xff]
    %v76 = vld [vmem:[#allocation3 + $0x10] sm:$0xff]
    %v77 = vld [vmem:[#allocation3 + $0x18] sm:$0xff]
    %v78 = vld [vmem:[#allocation3 + $0x20] sm:$0xff]
    %v79 = vld [vmem:[#allocation3 + $0x28] sm:$0xff]
    %v80 = vld [vmem:[#allocation3 + $0x30] sm:$0xff]
    %v81 = vld [vmem:[#allocation3 + $0x38] sm:$0xff]
    %vm82 = vcmask 523264
    %v84 = vsel %vm82, %v68, 0
    %v87 = vsel %vm82, %v69, 0
    %v90 = vsel %vm82, %v70, 0
    %v93 = vsel %vm82, %v71, 0
    %v96 = vsel %vm82, %v72, 0
    %v99 = vsel %vm82, %v73, 0
    %101 = vmatprep.subr.mxu0 0.0
    %102 = vmatpush1.msra.mxu0 %v74
    %103 = vmatprep.subr.mxu0 0.0
    %104 = vmatpush1.msra.mxu0 %v75
    %105 = vmatprep.subr.mxu0 0.0
    %106 = vmatpush1.msra.mxu0 %v76
    %107 = vmatprep.subr.mxu0 0.0
    %108 = vmatpush1.msra.mxu0 %v77
    %109 = vmatprep.subr.mxu0 0.0
    %110 = vmatpush1.msra.mxu0 %v78
    %111 = vmatprep.subr.mxu0 0.0
    %112 = vmatpush1.msra.mxu0 %v79
    %113 = vmatprep.subr.mxu0 0.0
    %114 = vmatpush1.msra.mxu0 %v80
    %115 = vmatprep.subr.mxu0 0.0
    %116 = vmatpush1.msra.mxu0 %v81
    %117 = vmatprep.subr.mxu0 0.0
    %118 = vmatpush1.msra.mxu0 0.0
    %119 = vmatprep.subr.mxu0 0.0
    %120 = vmatpush1.msra.mxu0 0.0
    %121 = vmatprep.subr.mxu0 0.0
    %122 = vmatpush1.msra.mxu0 0.0
    %123 = vmatprep.subr.mxu0 0.0
    %124 = vmatpush1.msra.mxu0 0.0
    %125 = vmatprep.subr.mxu0 0.0
    %126 = vmatpush1.msra.mxu0 0.0
    %127 = vmatprep.subr.mxu0 0.0
    %128 = vmatpush1.msra.mxu0 0.0
    %129 = vmatprep.subr.mxu0 0.0
    %130 = vmatpush1.msra.mxu0 0.0
    %131 = vmatprep.subr.mxu0 0.0
    %132 = vmatpush1.msra.mxu0 0.0
    %133 = vmatprep.subr.mxu0 0.0
    %134 = vmatpush1.msra.mxu0 0.0
    %135 = vmatprep.subr.mxu0 0.0
    %136 = vmatpush1.msra.mxu0 0.0
    %137 = vmatprep.subr.mxu0 0.0
    %138 = vmatpush1.msra.mxu0 0.0
    %139 = vmatprep.subr.mxu0 0.0
    %140 = vmatpush1.msra.mxu0 0.0
    %141 = vmatprep.subr.mxu0 0.0
    %142 = vmatpush1.msra.mxu0 0.0
    %143 = vmatprep.subr.mxu0 0.0
    %144 = vmatpush1.msra.mxu0 0.0
    %145 = vmatprep.subr.mxu0 0.0
    %146 = vmatpush1.msra.mxu0 0.0
    %147 = vmatprep.subr.mxu0 0.0
    %148 = vmatpush1.msra.mxu0 0.0
    %149 = vmatprep.subr.mxu0 0.0
    %150 = vmatpush1.msra.mxu0 0.0
    %151 = vmatprep.subr.mxu0 0.0
    %152 = vmatpush1.msra.mxu0 0.0
    %153 = vmatprep.subr.mxu0 0.0
    %154 = vmatpush1.msra.mxu0 0.0
    %155 = vmatprep.subr.mxu0 0.0
    %156 = vmatpush1.msra.mxu0 0.0
    %157 = vmatprep.subr.mxu0 0.0
    %158 = vmatpush1.msra.mxu0 0.0
    %159 = vmatprep.subr.mxu0 0.0
    %160 = vmatpush1.msra.mxu0 0.0
    %161 = vmatprep.subr.mxu0 0.0
    %162 = vmatpush1.msra.mxu0 0.0
    %163 = vmatprep.subr.mxu0 0.0
    %164 = vmatpush1.msra.mxu0 0.0
    %165 = vmatprep.mubr.f32.mxu0 0.0
    %166 = vmatmul.mubr.f32.gmra.mrb[0].mxu0 %v84
    %v167 = vpop.f32.mrb[0].mxu0
    %v168 = vadd.f32 0.0, %v167
    %v169 = vpop.f32.mrb[0].mxu0
    %170 = vmatprep.mubr.f32.mxu0 0.0
    %171 = vmatmul.mubr.f32.gmra.mrb[0].mxu0 %v87
    %v172 = vpop.f32.mrb[0].mxu0
    %v173 = vadd.f32 0.0, %v172
    %v174 = vpop.f32.mrb[0].mxu0
    %175 = vmatprep.mubr.f32.mxu0 0.0
    %176 = vmatmul.mubr.f32.gmra.mrb[0].mxu0 %v90
    %v177 = vpop.f32.mrb[0].mxu0
    %v178 = vadd.f32 0.0, %v177
    %v179 = vpop.f32.mrb[0].mxu0
    %180 = vmatprep.mubr.f32.mxu0 0.0
    %181 = vmatmul.mubr.f32.gmra.mrb[0].mxu0 %v93
    %v182 = vpop.f32.mrb[0].mxu0
    %v183 = vadd.f32 0.0, %v182
    %v184 = vpop.f32.mrb[0].mxu0
    %185 = vmatprep.mubr.f32.mxu0 0.0
    %186 = vmatmul.mubr.f32.gmra.mrb[0].mxu0 %v96
    %v187 = vpop.f32.mrb[0].mxu0
    %v188 = vadd.f32 0.0, %v187
    %v189 = vpop.f32.mrb[0].mxu0
    %190 = vmatprep.mubr.f32.mxu0 0.0
    %191 = vmatmul.mubr.f32.gmra.mrb[0].mxu0 %v99
    %v192 = vpop.f32.mrb[0].mxu0
    %v193 = vadd.f32 0.0, %v192
    %v194 = vpop.f32.mrb[0].mxu0
    %195 = vdwg.mxu0
    %v196 = vld [vmem:[%s3] sm:$0xff]
    %v197 = vld [vmem:[%s3 + $0x8] sm:$0xff]
    %v198 = vld [vmem:[%s3 + $0x10] sm:$0xff]
    %v199 = vld [vmem:[%s3 + $0x18] sm:$0xff]
    %v200 = vld [vmem:[%s3 + $0x20] sm:$0xff]
    %v201 = vld [vmem:[%s3 + $0x28] sm:$0xff]
    %vm202 = vcmask 392192
    %v204 = vsel %vm202, %v196, 0
    %v207 = vsel %vm202, %v197, 0
    %v210 = vsel %vm202, %v198, 0
    %v213 = vsel %vm202, %v199, 0
    %v216 = vsel %vm202, %v200, 0
    %v219 = vsel %vm202, %v201, 0
    %221 = vmatprep.subr.mxu0 0.0
    %222 = vmatpush1.msra.mxu0 %v168
    %223 = vmatprep.subr.mxu0 0.0
    %224 = vmatpush1.msra.mxu0 %v173
    %225 = vmatprep.subr.mxu0 0.0
    %226 = vmatpush1.msra.mxu0 %v178
    %227 = vmatprep.subr.mxu0 0.0
    %228 = vmatpush1.msra.mxu0 %v183
    %229 = vmatprep.subr.mxu0 0.0
    %230 = vmatpush1.msra.mxu0 %v188
    %231 = vmatprep.subr.mxu0 0.0
    %232 = vmatpush1.msra.mxu0 %v193
    %233 = vmatprep.subr.mxu0 0.0
    %234 = vmatpush1.msra.mxu0 0.0
    %235 = vmatprep.subr.mxu0 0.0
    %236 = vmatpush1.msra.mxu0 0.0
    %237 = vmatprep.subr.mxu0 0.0
    %238 = vmatpush1.msra.mxu0 0.0
    %239 = vmatprep.subr.mxu0 0.0
    %240 = vmatpush1.msra.mxu0 0.0
    %241 = vmatprep.subr.mxu0 0.0
    %242 = vmatpush1.msra.mxu0 0.0
    %243 = vmatprep.subr.mxu0 0.0
    %244 = vmatpush1.msra.mxu0 0.0
    %245 = vmatprep.subr.mxu0 0.0
    %246 = vmatpush1.msra.mxu0 0.0
    %247 = vmatprep.subr.mxu0 0.0
    %248 = vmatpush1.msra.mxu0 0.0
    %249 = vmatprep.subr.mxu0 0.0
    %250 = vmatpush1.msra.mxu0 0.0
    %251 = vmatprep.subr.mxu0 0.0
    %252 = vmatpush1.msra.mxu0 0.0
    %253 = vmatprep.subr.mxu0 0.0
    %254 = vmatpush1.msra.mxu0 0.0
    %255 = vmatprep.subr.mxu0 0.0
    %256 = vmatpush1.msra.mxu0 0.0
    %257 = vmatprep.subr.mxu0 0.0
    %258 = vmatpush1.msra.mxu0 0.0
    %259 = vmatprep.subr.mxu0 0.0
    %260 = vmatpush1.msra.mxu0 0.0
    %261 = vmatprep.subr.mxu0 0.0
    %262 = vmatpush1.msra.mxu0 0.0
    %263 = vmatprep.subr.mxu0 0.0
    %264 = vmatpush1.msra.mxu0 0.0
    %265 = vmatprep.subr.mxu0 0.0
    %266 = vmatpush1.msra.mxu0 0.0
    %267 = vmatprep.subr.mxu0 0.0
    %268 = vmatpush1.msra.mxu0 0.0
    %269 = vmatprep.subr.mxu0 0.0
    %270 = vmatpush1.msra.mxu0 0.0
    %271 = vmatprep.subr.mxu0 0.0
    %272 = vmatpush1.msra.mxu0 0.0
    %273 = vmatprep.subr.mxu0 0.0
    %274 = vmatpush1.msra.mxu0 0.0
    %275 = vmatprep.subr.mxu0 0.0
    %276 = vmatpush1.msra.mxu0 0.0
    %277 = vmatprep.subr.mxu0 0.0
    %278 = vmatpush1.msra.mxu0 0.0
    %279 = vmatprep.subr.mxu0 0.0
    %280 = vmatpush1.msra.mxu0 0.0
    %281 = vmatprep.subr.mxu0 0.0
    %282 = vmatpush1.msra.mxu0 0.0
    %283 = vmatprep.subr.mxu0 0.0
    %284 = vmatpush1.msra.mxu0 0.0
    %285 = vmatprep.mubr.f32.mxu0 0.0
    %286 = vmatmul.mubr.f32.gmra.mrb[0].mxu0 %v204
    %v287 = vpop.f32.mrb[0].mxu0
    %v288 = vadd.f32 0.0, %v287
    %v289 = vpop.f32.mrb[0].mxu0
    %290 = vmatprep.mubr.f32.mxu0 0.0
    %291 = vmatmul.mubr.f32.gmra.mrb[0].mxu0 %v207
    %v292 = vpop.f32.mrb[0].mxu0
    %v293 = vadd.f32 0.0, %v292
    %v294 = vpop.f32.mrb[0].mxu0
    %295 = vmatprep.mubr.f32.mxu0 0.0
    %296 = vmatmul.mubr.f32.gmra.mrb[0].mxu0 %v210
    %v297 = vpop.f32.mrb[0].mxu0
    %v298 = vadd.f32 0.0, %v297
    %v299 = vpop.f32.mrb[0].mxu0
    %300 = vmatprep.mubr.f32.mxu0 0.0
    %301 = vmatmul.mubr.f32.gmra.mrb[0].mxu0 %v213
    %v302 = vpop.f32.mrb[0].mxu0
    %v303 = vadd.f32 0.0, %v302
    %v304 = vpop.f32.mrb[0].mxu0
    %305 = vmatprep.mubr.f32.mxu0 0.0
    %306 = vmatmul.mubr.f32.gmra.mrb[0].mxu0 %v216
    %v307 = vpop.f32.mrb[0].mxu0
    %v308 = vadd.f32 0.0, %v307
    %v309 = vpop.f32.mrb[0].mxu0
    %310 = vmatprep.mubr.f32.mxu0 0.0
    %311 = vmatmul.mubr.f32.gmra.mrb[0].mxu0 %v219
    %v312 = vpop.f32.mrb[0].mxu0
    %v313 = vadd.f32 0.0, %v312
    %v314 = vpop.f32.mrb[0].mxu0
    %315 = vdwg.mxu0
    %v316 = vmul.f32 %v168, %v288
    %v317 = vmul.f32 %v173, %v293
    %v318 = vmul.f32 %v178, %v298
    %v319 = vmul.f32 %v183, %v303
    %v320 = vmul.f32 %v188, %v308
    %v321 = vmul.f32 %v193, %v313
    %v322 = vld [vmem:[%s4] sm:$0xff]
    %v323 = vld [vmem:[%s4 + $0x8] sm:$0xff]
    %v324 = vld [vmem:[%s4 + $0x10] sm:$0xff]
    %v325 = vld [vmem:[%s4 + $0x18] sm:$0xff]
    %v326 = vld [vmem:[%s4 + $0x20] sm:$0xff]
    %v327 = vld [vmem:[%s4 + $0x28] sm:$0xff]
    %329 = vset.pattern.permute.xlu0 0
    %330 = vperm.xlu0 %329, %v322
    %v331 = vpop.permute.xlu0 %330
    %334 = vset.pattern.permute.xlu0 0
    %335 = vperm.xlu0 %334, %v323
    %v336 = vpop.permute.xlu0 %335
    %339 = vset.pattern.permute.xlu0 0
    %340 = vperm.xlu0 %339, %v324
    %v341 = vpop.permute.xlu0 %340
    %344 = vset.pattern.permute.xlu0 0
    %345 = vperm.xlu0 %344, %v325
    %v346 = vpop.permute.xlu0 %345
    %349 = vset.pattern.permute.xlu0 0
    %350 = vperm.xlu0 %349, %v326
    %v351 = vpop.permute.xlu0 %350
    %354 = vset.pattern.permute.xlu0 0
    %355 = vperm.xlu0 %354, %v327
    %v356 = vpop.permute.xlu0 %355
    %v358 = vadd.f32 %v316, %v331
    %v359 = vadd.f32 %v317, %v336
    %v360 = vadd.f32 %v318, %v341
    %v361 = vadd.f32 %v319, %v346
    %v362 = vadd.f32 %v320, %v351
    %v363 = vadd.f32 %v321, %v356
    %v364 = vadd.f32 %v358, %v168
    %v365 = vadd.f32 %v359, %v173
    %v366 = vadd.f32 %v360, %v178
    %v367 = vadd.f32 %v361, %v183
    %v368 = vadd.f32 %v362, %v188
    %v369 = vadd.f32 %v363, %v193
    %s370 = scalar_lea.vmem %s3, 48
    %v371 = vld [vmem:[%s370] sm:$0xff]
    %v372 = vld [vmem:[%s370 + $0x8] sm:$0xff]
    %v373 = vld [vmem:[%s370 + $0x10] sm:$0xff]
    %v374 = vld [vmem:[%s370 + $0x18] sm:$0xff]
    %v375 = vld [vmem:[%s370 + $0x20] sm:$0xff]
    %v376 = vld [vmem:[%s370 + $0x28] sm:$0xff]
    %v378 = vsel %vm202, %v371, 0
    %v381 = vsel %vm202, %v372, 0
    %v384 = vsel %vm202, %v373, 0
    %v387 = vsel %vm202, %v374, 0
    %v390 = vsel %vm202, %v375, 0
    %v393 = vsel %vm202, %v376, 0
    %395 = vmatprep.subr.mxu0 0.0
    %396 = vmatpush1.msra.mxu0 %v364
    %397 = vmatprep.subr.mxu0 0.0
    %398 = vmatpush1.msra.mxu0 %v365
    %399 = vmatprep.subr.mxu0 0.0
    %400 = vmatpush1.msra.mxu0 %v366
    %401 = vmatprep.subr.mxu0 0.0
    %402 = vmatpush1.msra.mxu0 %v367
    %403 = vmatprep.subr.mxu0 0.0
    %404 = vmatpush1.msra.mxu0 %v368
    %405 = vmatprep.subr.mxu0 0.0
    %406 = vmatpush1.msra.mxu0 %v369
    %407 = vmatprep.subr.mxu0 0.0
    %408 = vmatpush1.msra.mxu0 0.0
    %409 = vmatprep.subr.mxu0 0.0
    %410 = vmatpush1.msra.mxu0 0.0
    %411 = vmatprep.subr.mxu0 0.0
    %412 = vmatpush1.msra.mxu0 0.0
    %413 = vmatprep.subr.mxu0 0.0
    %414 = vmatpush1.msra.mxu0 0.0
    %415 = vmatprep.subr.mxu0 0.0
    %416 = vmatpush1.msra.mxu0 0.0
    %417 = vmatprep.subr.mxu0 0.0
    %418 = vmatpush1.msra.mxu0 0.0
    %419 = vmatprep.subr.mxu0 0.0
    %420 = vmatpush1.msra.mxu0 0.0
    %421 = vmatprep.subr.mxu0 0.0
    %422 = vmatpush1.msra.mxu0 0.0
    %423 = vmatprep.subr.mxu0 0.0
    %424 = vmatpush1.msra.mxu0 0.0
    %425 = vmatprep.subr.mxu0 0.0
    %426 = vmatpush1.msra.mxu0 0.0
    %427 = vmatprep.subr.mxu0 0.0
    %428 = vmatpush1.msra.mxu0 0.0
    %429 = vmatprep.subr.mxu0 0.0
    %430 = vmatpush1.msra.mxu0 0.0
    %431 = vmatprep.subr.mxu0 0.0
    %432 = vmatpush1.msra.mxu0 0.0
    %433 = vmatprep.subr.mxu0 0.0
    %434 = vmatpush1.msra.mxu0 0.0
    %435 = vmatprep.subr.mxu0 0.0
    %436 = vmatpush1.msra.mxu0 0.0
    %437 = vmatprep.subr.mxu0 0.0
    %438 = vmatpush1.msra.mxu0 0.0
    %439 = vmatprep.subr.mxu0 0.0
    %440 = vmatpush1.msra.mxu0 0.0
    %441 = vmatprep.subr.mxu0 0.0
    %442 = vmatpush1.msra.mxu0 0.0
    %443 = vmatprep.subr.mxu0 0.0
    %444 = vmatpush1.msra.mxu0 0.0
    %445 = vmatprep.subr.mxu0 0.0
    %446 = vmatpush1.msra.mxu0 0.0
    %447 = vmatprep.subr.mxu0 0.0
    %448 = vmatpush1.msra.mxu0 0.0
    %449 = vmatprep.subr.mxu0 0.0
    %450 = vmatpush1.msra.mxu0 0.0
    %451 = vmatprep.subr.mxu0 0.0
    %452 = vmatpush1.msra.mxu0 0.0
    %453 = vmatprep.subr.mxu0 0.0
    %454 = vmatpush1.msra.mxu0 0.0
    %455 = vmatprep.subr.mxu0 0.0
    %456 = vmatpush1.msra.mxu0 0.0
    %457 = vmatprep.subr.mxu0 0.0
    %458 = vmatpush1.msra.mxu0 0.0
    %459 = vmatprep.mubr.f32.mxu0 0.0
    %460 = vmatmul.mubr.f32.gmra.mrb[0].mxu0 %v378
    %v461 = vpop.f32.mrb[0].mxu0
    %v462 = vadd.f32 0.0, %v461
    %v463 = vpop.f32.mrb[0].mxu0
    %464 = vmatprep.mubr.f32.mxu0 0.0
    %465 = vmatmul.mubr.f32.gmra.mrb[0].mxu0 %v381
    %v466 = vpop.f32.mrb[0].mxu0
    %v467 = vadd.f32 0.0, %v466
    %v468 = vpop.f32.mrb[0].mxu0
    %469 = vmatprep.mubr.f32.mxu0 0.0
    %470 = vmatmul.mubr.f32.gmra.mrb[0].mxu0 %v384
    %v471 = vpop.f32.mrb[0].mxu0
    %v472 = vadd.f32 0.0, %v471
    %v473 = vpop.f32.mrb[0].mxu0
    %474 = vmatprep.mubr.f32.mxu0 0.0
    %475 = vmatmul.mubr.f32.gmra.mrb[0].mxu0 %v387
    %v476 = vpop.f32.mrb[0].mxu0
    %v477 = vadd.f32 0.0, %v476
    %v478 = vpop.f32.mrb[0].mxu0
    %479 = vmatprep.mubr.f32.mxu0 0.0
    %480 = vmatmul.mubr.f32.gmra.mrb[0].mxu0 %v390
    %v481 = vpop.f32.mrb[0].mxu0
    %v482 = vadd.f32 0.0, %v481
    %v483 = vpop.f32.mrb[0].mxu0
    %484 = vmatprep.mubr.f32.mxu0 0.0
    %485 = vmatmul.mubr.f32.gmra.mrb[0].mxu0 %v393
    %v486 = vpop.f32.mrb[0].mxu0
    %v487 = vadd.f32 0.0, %v486
    %v488 = vpop.f32.mrb[0].mxu0
    %489 = vdwg.mxu0
    %v490 = vmul.f32 %v168, %v462
    %v491 = vmul.f32 %v173, %v467
    %v492 = vmul.f32 %v178, %v472
    %v493 = vmul.f32 %v183, %v477
    %v494 = vmul.f32 %v188, %v482
    %v495 = vmul.f32 %v193, %v487
    %s496 = scalar_lea.vmem %s4, 48
    %v497 = vld [vmem:[%s496] sm:$0xff]
    %v498 = vld [vmem:[%s496 + $0x8] sm:$0xff]
    %v499 = vld [vmem:[%s496 + $0x10] sm:$0xff]
    %v500 = vld [vmem:[%s496 + $0x18] sm:$0xff]
    %v501 = vld [vmem:[%s496 + $0x20] sm:$0xff]
    %v502 = vld [vmem:[%s496 + $0x28] sm:$0xff]
    %504 = vset.pattern.permute.xlu0 0
    %505 = vperm.xlu0 %504, %v497
    %v506 = vpop.permute.xlu0 %505
    %509 = vset.pattern.permute.xlu0 0
    %510 = vperm.xlu0 %509, %v498
    %v511 = vpop.permute.xlu0 %510
    %514 = vset.pattern.permute.xlu0 0
    %515 = vperm.xlu0 %514, %v499
    %v516 = vpop.permute.xlu0 %515
    %519 = vset.pattern.permute.xlu0 0
    %520 = vperm.xlu0 %519, %v500
    %v521 = vpop.permute.xlu0 %520
    %524 = vset.pattern.permute.xlu0 0
    %525 = vperm.xlu0 %524, %v501
    %v526 = vpop.permute.xlu0 %525
    %529 = vset.pattern.permute.xlu0 0
    %530 = vperm.xlu0 %529, %v502
    %v531 = vpop.permute.xlu0 %530
    %v533 = vadd.f32 %v490, %v506
    %v534 = vadd.f32 %v491, %v511
    %v535 = vadd.f32 %v492, %v516
    %v536 = vadd.f32 %v493, %v521
    %v537 = vadd.f32 %v494, %v526
    %v538 = vadd.f32 %v495, %v531
    %v539 = vadd.f32 %v533, %v364
    %v540 = vadd.f32 %v534, %v365
    %v541 = vadd.f32 %v535, %v366
    %v542 = vadd.f32 %v536, %v367
    %v543 = vadd.f32 %v537, %v368
    %v544 = vadd.f32 %v538, %v369
    %v545 = vld [vmem:[#allocation6] sm:$0xff]
    %v546 = vld [vmem:[#allocation6 + $0x8] sm:$0xff]
    %v547 = vld [vmem:[#allocation6 + $0x10] sm:$0xff]
    %v548 = vld [vmem:[#allocation6 + $0x18] sm:$0xff]
    %v549 = vld [vmem:[%s6] sm:$0xff]
    %v550 = vld [vmem:[%s6 + $0x8] sm:$0xff]
    %v551 = vld [vmem:[%s6 + $0x10] sm:$0xff]
    %v552 = vld [vmem:[%s6 + $0x18] sm:$0xff]
    %554 = vset.pattern.permute.xlu0 0
    %555 = vperm.xlu0 %554, %v549
    %v556 = vpop.permute.xlu0 %555
    %559 = vset.pattern.permute.xlu0 0
    %560 = vperm.xlu0 %559, %v550
    %v561 = vpop.permute.xlu0 %560
    %564 = vset.pattern.permute.xlu0 0
    %565 = vperm.xlu0 %564, %v551
    %v566 = vpop.permute.xlu0 %565
    %569 = vset.pattern.permute.xlu0 0
    %570 = vperm.xlu0 %569, %v552
    %v571 = vpop.permute.xlu0 %570
    %v574 = vsel %vm202, %v545, 0
    %v577 = vsel %vm202, %v546, 0
    %v580 = vsel %vm202, %v547, 0
    %v583 = vsel %vm202, %v548, 0
    %585 = vmatprep.subr.mxu0 0.0
    %586 = vmatpush1.msra.mxu0 %v168
    %587 = vmatprep.subr.mxu0 0.0
    %588 = vmatpush1.msra.mxu0 %v173
    %589 = vmatprep.subr.mxu0 0.0
    %590 = vmatpush1.msra.mxu0 %v178
    %591 = vmatprep.subr.mxu0 0.0
    %592 = vmatpush1.msra.mxu0 %v183
    %593 = vmatprep.subr.mxu0 0.0
    %594 = vmatpush1.msra.mxu0 %v188
    %595 = vmatprep.subr.mxu0 0.0
    %596 = vmatpush1.msra.mxu0 %v193
    %597 = vmatprep.subr.mxu0 0.0
    %598 = vmatpush1.msra.mxu0 0.0
    %599 = vmatprep.subr.mxu0 0.0
    %600 = vmatpush1.msra.mxu0 0.0
    %601 = vmatprep.subr.mxu0 0.0
    %602 = vmatpush1.msra.mxu0 0.0
    %603 = vmatprep.subr.mxu0 0.0
    %604 = vmatpush1.msra.mxu0 0.0
    %605 = vmatprep.subr.mxu0 0.0
    %606 = vmatpush1.msra.mxu0 0.0
    %607 = vmatprep.subr.mxu0 0.0
    %608 = vmatpush1.msra.mxu0 0.0
    %609 = vmatprep.subr.mxu0 0.0
    %610 = vmatpush1.msra.mxu0 0.0
    %611 = vmatprep.subr.mxu0 0.0
    %612 = vmatpush1.msra.mxu0 0.0
    %613 = vmatprep.subr.mxu0 0.0
    %614 = vmatpush1.msra.mxu0 0.0
    %615 = vmatprep.subr.mxu0 0.0
    %616 = vmatpush1.msra.mxu0 0.0
    %617 = vmatprep.subr.mxu0 0.0
    %618 = vmatpush1.msra.mxu0 0.0
    %619 = vmatprep.subr.mxu0 0.0
    %620 = vmatpush1.msra.mxu0 0.0
    %621 = vmatprep.subr.mxu0 0.0
    %622 = vmatpush1.msra.mxu0 0.0
    %623 = vmatprep.subr.mxu0 0.0
    %624 = vmatpush1.msra.mxu0 0.0
    %625 = vmatprep.subr.mxu0 0.0
    %626 = vmatpush1.msra.mxu0 0.0
    %627 = vmatprep.subr.mxu0 0.0
    %628 = vmatpush1.msra.mxu0 0.0
    %629 = vmatprep.subr.mxu0 0.0
    %630 = vmatpush1.msra.mxu0 0.0
    %631 = vmatprep.subr.mxu0 0.0
    %632 = vmatpush1.msra.mxu0 0.0
    %633 = vmatprep.subr.mxu0 0.0
    %634 = vmatpush1.msra.mxu0 0.0
    %635 = vmatprep.subr.mxu0 0.0
    %636 = vmatpush1.msra.mxu0 0.0
    %637 = vmatprep.subr.mxu0 0.0
    %638 = vmatpush1.msra.mxu0 0.0
    %639 = vmatprep.subr.mxu0 0.0
    %640 = vmatpush1.msra.mxu0 0.0
    %641 = vmatprep.subr.mxu0 0.0
    %642 = vmatpush1.msra.mxu0 0.0
    %643 = vmatprep.subr.mxu0 0.0
    %644 = vmatpush1.msra.mxu0 0.0
    %645 = vmatprep.subr.mxu0 0.0
    %646 = vmatpush1.msra.mxu0 0.0
    %647 = vmatprep.subr.mxu0 0.0
    %648 = vmatpush1.msra.mxu0 0.0
    %649 = vmatprep.mubr.f32.mxu0 0.0
    %650 = vmatmul.mubr.f32.gmra.mrb[0].mxu0 %v574
    %v651 = vpop.f32.mrb[0].mxu0
    %v652 = vadd.f32 %v556, %v651
    %v653 = vpop.f32.mrb[0].mxu0
    %654 = vmatprep.mubr.f32.mxu0 0.0
    %655 = vmatmul.mubr.f32.gmra.mrb[0].mxu0 %v577
    %v656 = vpop.f32.mrb[0].mxu0
    %v657 = vadd.f32 %v561, %v656
    %v658 = vpop.f32.mrb[0].mxu0
    %659 = vmatprep.mubr.f32.mxu0 0.0
    %660 = vmatmul.mubr.f32.gmra.mrb[0].mxu0 %v580
    %v661 = vpop.f32.mrb[0].mxu0
    %v662 = vadd.f32 %v566, %v661
    %v663 = vpop.f32.mrb[0].mxu0
    %664 = vmatprep.mubr.f32.mxu0 0.0
    %665 = vmatmul.mubr.f32.gmra.mrb[0].mxu0 %v583
    %v666 = vpop.f32.mrb[0].mxu0
    %v667 = vadd.f32 %v571, %v666
    %v668 = vpop.f32.mrb[0].mxu0
    %669 = vdwg.mxu0
    %v670 = vmax.f32 %v652, 0.0
    %v671 = vmax.f32 %v657, 0.0
    %v672 = vmax.f32 %v662, 0.0
    %v673 = vmax.f32 %v667, 0.0
    %v674 = vld [vmem:[%s7] sm:$0xff]
    %v675 = vld [vmem:[%s7 + $0x8] sm:$0xff]
    %v676 = vld [vmem:[%s8] sm:$0xff]
    %v677 = vld [vmem:[%s8 + $0x8] sm:$0xff]
    %679 = vset.pattern.permute.xlu0 0
    %680 = vperm.xlu0 %679, %v676
    %v681 = vpop.permute.xlu0 %680
    %684 = vset.pattern.permute.xlu0 0
    %685 = vperm.xlu0 %684, %v677
    %v686 = vpop.permute.xlu0 %685
    %vm688 = vcmask 261120
    %v690 = vsel %vm688, %v674, 0
    %v693 = vsel %vm688, %v675, 0
    %695 = vmatprep.subr.mxu0 0.0
    %696 = vmatpush1.msra.mxu0 %v670
    %697 = vmatprep.subr.mxu0 0.0
    %698 = vmatpush1.msra.mxu0 %v671
    %699 = vmatprep.subr.mxu0 0.0
    %700 = vmatpush1.msra.mxu0 %v672
    %701 = vmatprep.subr.mxu0 0.0
    %702 = vmatpush1.msra.mxu0 %v673
    %703 = vmatprep.subr.mxu0 0.0
    %704 = vmatpush1.msra.mxu0 0.0
    %705 = vmatprep.subr.mxu0 0.0
    %706 = vmatpush1.msra.mxu0 0.0
    %707 = vmatprep.subr.mxu0 0.0
    %708 = vmatpush1.msra.mxu0 0.0
    %709 = vmatprep.subr.mxu0 0.0
    %710 = vmatpush1.msra.mxu0 0.0
    %711 = vmatprep.subr.mxu0 0.0
    %712 = vmatpush1.msra.mxu0 0.0
    %713 = vmatprep.subr.mxu0 0.0
    %714 = vmatpush1.msra.mxu0 0.0
    %715 = vmatprep.subr.mxu0 0.0
    %716 = vmatpush1.msra.mxu0 0.0
    %717 = vmatprep.subr.mxu0 0.0
    %718 = vmatpush1.msra.mxu0 0.0
    %719 = vmatprep.subr.mxu0 0.0
    %720 = vmatpush1.msra.mxu0 0.0
    %721 = vmatprep.subr.mxu0 0.0
    %722 = vmatpush1.msra.mxu0 0.0
    %723 = vmatprep.subr.mxu0 0.0
    %724 = vmatpush1.msra.mxu0 0.0
    %725 = vmatprep.subr.mxu0 0.0
    %726 = vmatpush1.msra.mxu0 0.0
    %727 = vmatprep.subr.mxu0 0.0
    %728 = vmatpush1.msra.mxu0 0.0
    %729 = vmatprep.subr.mxu0 0.0
    %730 = vmatpush1.msra.mxu0 0.0
    %731 = vmatprep.subr.mxu0 0.0
    %732 = vmatpush1.msra.mxu0 0.0
    %733 = vmatprep.subr.mxu0 0.0
    %734 = vmatpush1.msra.mxu0 0.0
    %735 = vmatprep.subr.mxu0 0.0
    %736 = vmatpush1.msra.mxu0 0.0
    %737 = vmatprep.subr.mxu0 0.0
    %738 = vmatpush1.msra.mxu0 0.0
    %739 = vmatprep.subr.mxu0 0.0
    %740 = vmatpush1.msra.mxu0 0.0
    %741 = vmatprep.subr.mxu0 0.0
    %742 = vmatpush1.msra.mxu0 0.0
    %743 = vmatprep.subr.mxu0 0.0
    %744 = vmatpush1.msra.mxu0 0.0
    %745 = vmatprep.subr.mxu0 0.0
    %746 = vmatpush1.msra.mxu0 0.0
    %747 = vmatprep.subr.mxu0 0.0
    %748 = vmatpush1.msra.mxu0 0.0
    %749 = vmatprep.subr.mxu0 0.0
    %750 = vmatpush1.msra.mxu0 0.0
    %751 = vmatprep.subr.mxu0 0.0
    %752 = vmatpush1.msra.mxu0 0.0
    %753 = vmatprep.subr.mxu0 0.0
    %754 = vmatpush1.msra.mxu0 0.0
    %755 = vmatprep.subr.mxu0 0.0
    %756 = vmatpush1.msra.mxu0 0.0
    %757 = vmatprep.subr.mxu0 0.0
    %758 = vmatpush1.msra.mxu0 0.0
    %759 = vmatprep.mubr.f32.mxu0 0.0
    %760 = vmatmul.mubr.f32.gmra.mrb[0].mxu0 %v690
    %v761 = vpop.f32.mrb[0].mxu0
    %v762 = vadd.f32 %v681, %v761
    %v763 = vpop.f32.mrb[0].mxu0
    %764 = vmatprep.mubr.f32.mxu0 0.0
    %765 = vmatmul.mubr.f32.gmra.mrb[0].mxu0 %v693
    %v766 = vpop.f32.mrb[0].mxu0
    %v767 = vadd.f32 %v686, %v766
    %v768 = vpop.f32.mrb[0].mxu0
    %769 = vdwg.mxu0
    %v770 = vmax.f32 %v762, 0.0
    %v771 = vmax.f32 %v767, 0.0
    %s772 = sld [smem:[#allocation2]]
    %v773 = vld [vmem:[%s9] sm:$0x1]
    %v774 = vld [vmem:[%s10] sm:$0x1]
    %vm775 = vcmask 130048
    %v777 = vsel %vm775, %v774, 0
    %779 = vmatprep.subr.mxu0 0.0
    %780 = vmatpush1.msra.mxu0 %v770
    %781 = vmatprep.subr.mxu0 0.0
    %782 = vmatpush1.msra.mxu0 %v771
    %783 = vmatprep.subr.mxu0 0.0
    %784 = vmatpush1.msra.mxu0 0.0
    %785 = vmatprep.subr.mxu0 0.0
    %786 = vmatpush1.msra.mxu0 0.0
    %787 = vmatprep.subr.mxu0 0.0
    %788 = vmatpush1.msra.mxu0 0.0
    %789 = vmatprep.subr.mxu0 0.0
    %790 = vmatpush1.msra.mxu0 0.0
    %791 = vmatprep.subr.mxu0 0.0
    %792 = vmatpush1.msra.mxu0 0.0
    %793 = vmatprep.subr.mxu0 0.0
    %794 = vmatpush1.msra.mxu0 0.0
    %795 = vmatprep.subr.mxu0 0.0
    %796 = vmatpush1.msra.mxu0 0.0
    %797 = vmatprep.subr.mxu0 0.0
    %798 = vmatpush1.msra.mxu0 0.0
    %799 = vmatprep.subr.mxu0 0.0
    %800 = vmatpush1.msra.mxu0 0.0
    %801 = vmatprep.subr.mxu0 0.0
    %802 = vmatpush1.msra.mxu0 0.0
    %803 = vmatprep.subr.mxu0 0.0
    %804 = vmatpush1.msra.mxu0 0.0
    %805 = vmatprep.subr.mxu0 0.0
    %806 = vmatpush1.msra.mxu0 0.0
    %807 = vmatprep.subr.mxu0 0.0
    %808 = vmatpush1.msra.mxu0 0.0
    %809 = vmatprep.subr.mxu0 0.0
    %810 = vmatpush1.msra.mxu0 0.0
    %811 = vmatprep.subr.mxu0 0.0
    %812 = vmatpush1.msra.mxu0 0.0
    %813 = vmatprep.subr.mxu0 0.0
    %814 = vmatpush1.msra.mxu0 0.0
    %815 = vmatprep.subr.mxu0 0.0
    %816 = vmatpush1.msra.mxu0 0.0
    %817 = vmatprep.subr.mxu0 0.0
    %818 = vmatpush1.msra.mxu0 0.0
    %819 = vmatprep.subr.mxu0 0.0
    %820 = vmatpush1.msra.mxu0 0.0
    %821 = vmatprep.subr.mxu0 0.0
    %822 = vmatpush1.msra.mxu0 0.0
    %823 = vmatprep.subr.mxu0 0.0
    %824 = vmatpush1.msra.mxu0 0.0
    %825 = vmatprep.subr.mxu0 0.0
    %826 = vmatpush1.msra.mxu0 0.0
    %827 = vmatprep.subr.mxu0 0.0
    %828 = vmatpush1.msra.mxu0 0.0
    %829 = vmatprep.subr.mxu0 0.0
    %830 = vmatpush1.msra.mxu0 0.0
    %831 = vmatprep.subr.mxu0 0.0
    %832 = vmatpush1.msra.mxu0 0.0
    %833 = vmatprep.subr.mxu0 0.0
    %834 = vmatpush1.msra.mxu0 0.0
    %835 = vmatprep.subr.mxu0 0.0
    %836 = vmatpush1.msra.mxu0 0.0
    %837 = vmatprep.subr.mxu0 0.0
    %838 = vmatpush1.msra.mxu0 0.0
    %839 = vmatprep.subr.mxu0 0.0
    %840 = vmatpush1.msra.mxu0 0.0
    %841 = vmatprep.subr.mxu0 0.0
    %842 = vmatpush1.msra.mxu0 0.0
    %843 = vmatprep.mubr.f32.mxu0 0.0
    %844 = vmatmul.mubr.f32.gmra.mrb[0].mxu0 %v777
    %v845 = vpop.f32.mrb[0].mxu0
    %v846 = vadd.f32 0.0, %v845
    %v847 = vpop.f32.mrb[0].mxu0
    %848 = vdwg.mxu0
    %v850 = vsel %vm202, %v773, 0
    %852 = vmatprep.subr.mxu0 0.0
    %853 = vmatpush1.msra.mxu0 %v539
    %854 = vmatprep.subr.mxu0 0.0
    %855 = vmatpush1.msra.mxu0 %v540
    %856 = vmatprep.subr.mxu0 0.0
    %857 = vmatpush1.msra.mxu0 %v541
    %858 = vmatprep.subr.mxu0 0.0
    %859 = vmatpush1.msra.mxu0 %v542
    %860 = vmatprep.subr.mxu0 0.0
    %861 = vmatpush1.msra.mxu0 %v543
    %862 = vmatprep.subr.mxu0 0.0
    %863 = vmatpush1.msra.mxu0 %v544
    %864 = vmatprep.subr.mxu0 0.0
    %865 = vmatpush1.msra.mxu0 0.0
    %866 = vmatprep.subr.mxu0 0.0
    %867 = vmatpush1.msra.mxu0 0.0
    %868 = vmatprep.subr.mxu0 0.0
    %869 = vmatpush1.msra.mxu0 0.0
    %870 = vmatprep.subr.mxu0 0.0
    %871 = vmatpush1.msra.mxu0 0.0
    %872 = vmatprep.subr.mxu0 0.0
    %873 = vmatpush1.msra.mxu0 0.0
    %874 = vmatprep.subr.mxu0 0.0
    %875 = vmatpush1.msra.mxu0 0.0
    %876 = vmatprep.subr.mxu0 0.0
    %877 = vmatpush1.msra.mxu0 0.0
    %878 = vmatprep.subr.mxu0 0.0
    %879 = vmatpush1.msra.mxu0 0.0
    %880 = vmatprep.subr.mxu0 0.0
    %881 = vmatpush1.msra.mxu0 0.0
    %882 = vmatprep.subr.mxu0 0.0
    %883 = vmatpush1.msra.mxu0 0.0
    %884 = vmatprep.subr.mxu0 0.0
    %885 = vmatpush1.msra.mxu0 0.0
    %886 = vmatprep.subr.mxu0 0.0
    %887 = vmatpush1.msra.mxu0 0.0
    %888 = vmatprep.subr.mxu0 0.0
    %889 = vmatpush1.msra.mxu0 0.0
    %890 = vmatprep.subr.mxu0 0.0
    %891 = vmatpush1.msra.mxu0 0.0
    %892 = vmatprep.subr.mxu0 0.0
    %893 = vmatpush1.msra.mxu0 0.0
    %894 = vmatprep.subr.mxu0 0.0
    %895 = vmatpush1.msra.mxu0 0.0
    %896 = vmatprep.subr.mxu0 0.0
    %897 = vmatpush1.msra.mxu0 0.0
    %898 = vmatprep.subr.mxu0 0.0
    %899 = vmatpush1.msra.mxu0 0.0
    %900 = vmatprep.subr.mxu0 0.0
    %901 = vmatpush1.msra.mxu0 0.0
    %902 = vmatprep.subr.mxu0 0.0
    %903 = vmatpush1.msra.mxu0 0.0
    %904 = vmatprep.subr.mxu0 0.0
    %905 = vmatpush1.msra.mxu0 0.0
    %906 = vmatprep.subr.mxu0 0.0
    %907 = vmatpush1.msra.mxu0 0.0
    %908 = vmatprep.subr.mxu0 0.0
    %909 = vmatpush1.msra.mxu0 0.0
    %910 = vmatprep.subr.mxu0 0.0
    %911 = vmatpush1.msra.mxu0 0.0
    %912 = vmatprep.subr.mxu0 0.0
    %913 = vmatpush1.msra.mxu0 0.0
    %914 = vmatprep.subr.mxu0 0.0
    %915 = vmatpush1.msra.mxu0 0.0
    %916 = vmatprep.mubr.f32.mxu0 0.0
    %917 = vmatmul.mubr.f32.gmra.mrb[0].mxu0 %v850
    %v918 = vpop.f32.mrb[0].mxu0
    %v919 = vadd.f32 %v846, %v918
    %v920 = vpop.f32.mrb[0].mxu0
    %921 = vdwg.mxu0
    %v922 = vstv %s772
    %v923 = vadd.f32 %v919, %v922
    %v924 = vxor.u32 %v923, 2147483648
    %v925 = vmul.f32 %v924, 1.442695
    %v926 = vpow.pop %v925
    %v927 = vadd.f32 %v926, 1.0
    %v928 = vrcp.pop %v927
    %v929 = vmul.f32 1.0, %v928
    %930 = vst [vmem:[#allocation8] sm:$0x1] %v929
    // Predicated region
    $region54: #{tpu_custom_call.1} parent=1 // pred_check
      _
    $region55: #{tpu_custom_call.1} parent=1 // pred_check_branch
      %932 = sbr.rel (0) target = $region57
    $region56: #{tpu_custom_call.1} parent=1 // pred_region
      %s934 = ssub.s32 16, 16
      %935 = vsyncadd [#allocation5], %s934
      %s937 = sshll.u32 [#allocation8], 4
      %s938 = int_to_ptr.vmem [resolvable:$true] %s937
      %940 = dma.vmem_to_hbm [thread:$0]  %s938, 16, %s11, [#allocation5]
    $region57: #{tpu_custom_call.1} parent=1 // pred_fallthru
      _
    // Predicated region
    $region58: #{tpu_custom_call.1} parent=1 // pred_check
      _
    $region59: #{tpu_custom_call.1} parent=1 // pred_check_branch
      %942 = sbr.rel (0) target = $region61
    $region60: #{tpu_custom_call.1} parent=1 // pred_region
      %943 = dma.done [#allocation5], 16
    $region61: #{tpu_custom_call.1} parent=1 // pred_fallthru
      _
    %944 = vsyncpa [#allocation4], 1
    %945 = vsyncpa [#allocation7], 1
    %946 = vsyncpa [#allocation5], 1

</llo_original>
